<compile_context>
chip_gen: v7x
topology: tpu7x:2x2x1
jax: 0.10.0
libtpu: 0.0.40
codegen_flags: <defaults>
</compile_context>

<pallas_src>
import functools

import jax
import jax.numpy as jnp
from jax.experimental import pallas as pl
from jax.experimental.pallas import tpu as pltpu


# --------------------------------------------------------------------------
# Tiled (1, 2)-swap kernel: the hot path used by the backbone.
# --------------------------------------------------------------------------
def _swap12_kernel(x_ref, o_ref):
    # x_ref: (1, tc, th, W) tile in VMEM  ->  o_ref: (1, th, tc, W)
    o_ref[...] = jnp.transpose(x_ref[...], (0, 2, 1, 3))


def _pick_tile(dim, max_rows):
    """Largest tile that divides `dim`, preferring multiples of 8.

    Returns `dim` itself if it fits (block == full array dim is always a
    legal layout), otherwise the largest multiple-of-8 divisor <= max_rows,
    otherwise the largest divisor <= max_rows.
    """
    max_rows = max(int(max_rows), 1)
    if dim <= max_rows:
        return dim
    best = None
    for t in range(8, max_rows + 1, 8):
        if dim % t == 0:
            best = t
    if best is not None:
        return best
    for t in range(max_rows, 0, -1):
        if dim % t == 0:
            return t
    return dim


def pallas_transpose(x, dim0, dim1, *, block_bytes_target=2 << 20):
    """Equivalent of torch.Tensor.transpose(dim0, dim1) for a 4-D array."""
    assert x.ndim == 4, "this kernel handles 4-D inputs (B, C, H, W)"
    ndim = x.ndim
    dim0 = dim0 % ndim
    dim1 = dim1 % ndim
    if dim0 == dim1:
        return x
    if {dim0, dim1} != {1, 2}:
        # Not the backbone's hot path; fall back to the generic per-batch
        # block kernel (kept from the previous, validated version).
        return _pallas_transpose_generic(x, dim0, dim1)

    B, C, H, W = x.shape
    itemsize = x.dtype.itemsize

    # Tile budget: keep each block <= ~2 MiB so double-buffered in + out
    # (~4x block) stays well inside v7x's 32 MiB scoped VMEM default.
    max_block_elems = max(block_bytes_target // itemsize, 8 * W)
    max_rows = max(max_block_elems // W, 8)          # rows of W lane elements
    th = _pick_tile(H, max_rows)                     # input-tile sublane extent
    tc = _pick_tile(C, max(max_rows // th, 1))       # output-tile sublane extent
    block_bytes = tc * th * W * itemsize

    grid = (B, C // tc, H // th)

    cost = pl.CostEstimate(
        flops=0,
        transcendentals=0,
        bytes_accessed=2 * x.size * itemsize,
    )
    vmem_limit = int(min(32 << 20, max(8 << 20, 8 * block_bytes)))

    return pl.pallas_call(
        _swap12_kernel,
        out_shape=jax.ShapeDtypeStruct((B, H, C, W), x.dtype),
        grid_spec=pl.GridSpec(
            grid=grid,
            in_specs=[
                pl.BlockSpec((1, tc, th, W), lambda b, c, h: (b, c, h, 0)),
            ],
            out_specs=pl.BlockSpec((1, th, tc, W), lambda b, c, h: (b, h, c, 0)),
        ),
        compiler_params=pltpu.CompilerParams(
            dimension_semantics=("parallel", "parallel", "parallel"),
            vmem_limit_bytes=vmem_limit,
        ),
        cost_estimate=cost,
    )(x)


# --------------------------------------------------------------------------
# Generic fallback: whole per-batch block, arbitrary non-batch axis swap.
# --------------------------------------------------------------------------
def _generic_kernel(perm, x_ref, o_ref):
    o_ref[...] = jnp.transpose(x_ref[...], perm)


def _pallas_transpose_generic(x, dim0, dim1):
    ndim = x.ndim
    assert 0 not in (dim0, dim1), "batch axis is the grid axis in this kernel"
    perm = list(range(ndim))
    perm[dim0], perm[dim1] = perm[dim1], perm[dim0]
    perm = tuple(perm)

    B = x.shape[0]
    out_shape_full = tuple(x.shape[p] for p in perm)
    in_block = (1,) + x.shape[1:]
    out_block = (1,) + out_shape_full[1:]

    return pl.pallas_call(
        functools.partial(_generic_kernel, perm),
        out_shape=jax.ShapeDtypeStruct(out_shape_full, x.dtype),
        grid_spec=pl.GridSpec(
            grid=(B,),
            in_specs=[pl.BlockSpec(in_block, lambda b: (b, 0, 0, 0))],
            out_specs=pl.BlockSpec(out_block, lambda b: (b, 0, 0, 0)),
        ),
        compiler_params=pltpu.CompilerParams(
            dimension_semantics=("parallel",),
        ),
        cost_estimate=pl.CostEstimate(
            flops=0, transcendentals=0,
            bytes_accessed=2 * x.size * x.dtype.itemsize),
    )(x)


# --------------------------------------------------------------------------
# Module-equivalent forward with a size-threshold dispatch.
# --------------------------------------------------------------------------
def transpose(x, dim0, dim1, *, min_pallas_bytes=1 << 20):
    """Forward of Transpose(dim0, dim1).  Tiny activations go to XLA's native
    transpose: launch + ~0.35 us/grid-step overhead dwarfs the data movement
    for KB-sized inputs, so a standalone kernel can only lose there."""
    if x.size * x.dtype.itemsize < min_pallas_bytes:
        return jnp.swapaxes(x, dim0, dim1)
    return pallas_transpose(x, dim0, dim1)


if __name__ == "__main__":
    key = jax.random.PRNGKey(0)
    k_small, k_big = jax.random.split(key)
    dim0, dim1 = 1, 2  # Transpose(1, 2): (B, C, H, W) -> (B, H, C, W)

    # 1) Small shape consistent with the module's synthetic config.
    B, C, H, W = 2, 4, 16, 16
    x_small = jax.random.normal(k_small, (B, C, H, W), dtype=jnp.float32)
    out_small = jax.block_until_ready(pallas_transpose(x_small, dim0, dim1))
    ref_small = jnp.swapaxes(x_small, dim0, dim1)
    assert out_small.shape == ref_small.shape, (out_small.shape, ref_small.shape)
    assert out_small.dtype == ref_small.dtype
    assert bool(jnp.array_equal(out_small, ref_small))

    # 2) Larger, lane-dense shape that exercises the C/H grid tiling and the
    #    swapped index_maps (tc=32, th=128, W=128 -> grid (2, 2, 1)).
    x_big = jax.random.normal(k_big, (2, 64, 128, 128), dtype=jnp.float32)
    out_big = jax.block_until_ready(pallas_transpose(x_big, dim0, dim1))
    ref_big = jnp.swapaxes(x_big, dim0, dim1)
    assert out_big.shape == ref_big.shape
    assert bool(jnp.array_equal(out_big, ref_big))

    # 3) Module-level dispatcher (tiny input routes to XLA's transpose).
    out_disp = jax.block_until_ready(transpose(x_small, dim0, dim1))
    assert bool(jnp.array_equal(out_disp, ref_small))

    print("KERNEL_OK")
</pallas_src>

<mosaic_0001>
module attributes {stable_mosaic.version = 11 : i64} {
  func.func @_swap12_kernel(%arg0: i32, %arg1: i32, %arg2: i32, %arg3: memref<1x4x16x16xf32, #tpu.memory_space<vmem>>, %arg4: memref<1x16x4x16xf32, #tpu.memory_space<vmem>>) attributes {dimension_semantics = [#tpu.dimension_semantics<parallel>, #tpu.dimension_semantics<parallel>, #tpu.dimension_semantics<parallel>], iteration_bounds = array<i64: 2, 1, 1>, scalar_prefetch = 0 : i64, scratch_operands = 0 : i64, tpu.core_type = #tpu.core_type<tc>, window_params = [{transform_indices = @transform_0, window_bounds = array<i64: 1, 4, 16, 16>}, {transform_indices = @transform_1, window_bounds = array<i64: 1, 16, 4, 16>}]} {
    %c0 = arith.constant 0 : index
    %c0_0 = arith.constant 0 : index
    %c0_1 = arith.constant 0 : index
    %c0_2 = arith.constant 0 : index
    %0 = vector.load %arg3[%c0, %c0_0, %c0_1, %c0_2] : memref<1x4x16x16xf32, #tpu.memory_space<vmem>>, vector<1x4x16x16xf32>
    %1 = tpu.transpose %0, [0, 2, 1, 3] : vector<1x4x16x16xf32> -> vector<1x16x4x16xf32>
    %c0_3 = arith.constant 0 : index
    %c0_4 = arith.constant 0 : index
    %c0_5 = arith.constant 0 : index
    %c0_6 = arith.constant 0 : index
    %2 = vector.load %arg4[%c0_3, %c0_4, %c0_5, %c0_6] : memref<1x16x4x16xf32, #tpu.memory_space<vmem>>, vector<1x16x4x16xf32>
    tpu.vector_store %arg4[%c0_3, %c0_4, %c0_5, %c0_6], %1 {strides = array<i32>} : memref<1x16x4x16xf32, #tpu.memory_space<vmem>>, vector<1x16x4x16xf32>,
    return
  }
  func.func @transform_0(%arg0: i32, %arg1: i32, %arg2: i32) -> (i32, i32, i32, i32) {
    %c0_i32 = arith.constant 0 : i32
    %c0_i32_0 = arith.constant 0 : i32
    return %arg0, %arg1, %arg2, %c0_i32 : i32, i32, i32, i32
  }
  func.func @transform_1(%arg0: i32, %arg1: i32, %arg2: i32) -> (i32, i32, i32, i32) {
    %c0_i32 = arith.constant 0 : i32
    %c0_i32_0 = arith.constant 0 : i32
    return %arg0, %arg2, %arg1, %c0_i32 : i32, i32, i32, i32
  }
}

</mosaic_0001>

<llo_original>
// kernel: tpu_custom_call.1
$region0: #{tpu_custom_call.1}
  #allocation0 [shape = 'u32[]', space=smem, size = 0x4, offset = 0x4, fixed_abs, tag = 'smem constant byte address 0x4 - core index']
  #allocation1 [shape = 'u32[144,128]{1,0:T(1,128)}', space=vmem, size = 0x12000, scoped, tag = 'internal scratch']
  %s0 = inlined_call_operand.hbm [shape: f32[2,4,16,16], index: 0, kind: input, shape index: {}]
  %s1 = inlined_call_operand.hbm [shape: f32[2,16,4,16], index: 1, kind: output, shape index: {}]
  %s2 = sld [smem:[#allocation0]]
  $region41: #{tpu_custom_call.1} parent=0
    _
  %s4 = ssub.s32 1, %s2
  %s5 = scalar_select 0, %s4, %s2
  $region1: #{tpu_custom_call.1} parent=0
    #allocation2 [shape = 'u8[65536]{0}', space=vmem, size = 0x10000, scoped, tag = 'input window, operand 0']
    #allocation3 [shape = 's32[2]{0}', space=sflag, size = 0x8, scoped, tag = 'scoped memory for tpu_custom_call.1']
    #allocation4 [shape = 's32[2]{0}', space=sflag, size = 0x8, scoped, tag = 'scoped memory for tpu_custom_call.1']
    #allocation5 [shape = 'u8[65536]{0}', space=vmem, size = 0x10000, scoped, tag = 'output window, operand 0']
    %6 = vsyncpa [#allocation3], 0
    %s7 = scalar_lea.sflag [#allocation3], 1
    %8 = vsyncpa %s7, 0
    %9 = vsyncpa [#allocation4], 0
    %s10 = scalar_lea.sflag [#allocation4], 1
    %11 = vsyncpa %s10, 0
    loop: start=0, step=1, limit=4
    $region2: #{tpu_custom_call.1} parent=1 // loop_pre_header
      _
    $region3: #{tpu_custom_call.1} parent=1 // loop_header
      %s13 = sphi 0, %s17
      %p14 = scmp.ge.s32.totalorder %s13, 4
      %s20 = sphi 0, %s39
      %s21 = sphi 0, %s35
      %s22 = sphi 0, %s31
      %s23 = sphi 0, %s20
      %s24 = sphi 0, %s21
      %s25 = sphi 0, %s22
      %s26 = sphi 0, %s23
      %s27 = sphi 0, %s24
      %s28 = sphi 0, %s25
      %s46 = sphi 0, %s48
      %s49 = sphi 0, %s46
      %s50 = sphi 0, %s49
      %s66 = sphi 0, %s50
      %s76 = sphi 0, %s78
      %s79 = sphi 0, %s76
      %s80 = sphi 0, %s79
      %s96 = sphi 0, %s80
    $region4: #{tpu_custom_call.1} parent=1 // loop_header_branch
      %16 = sbr.rel (%p14) target = $region8
    $region5: #{tpu_custom_call.1} parent=1 // loop_body
      %s18 = ssub.s32 %s13, 1
      %s19 = ssub.s32 %s13, 2
      %s29 = sadd.s32 1, %s22
      %p30 = scmp.ge.s32.totalorder %s29, 1
      %s31 = scalar_select %p30, 0, %s29
      %s32 = sadd.s32 1, %s21
      %s33 = scalar_select %p30, %s32, %s21
      %p34 = scmp.ge.s32.totalorder %s33, 1
      %s35 = scalar_select %p34, 0, %s33
      %s36 = sadd.s32 1, %s20
      %s37 = scalar_select %p34, %s36, %s20
      %p38 = scmp.ge.s32.totalorder %s37, 2
      %s39 = scalar_select %p38, 0, %s37
      %s40 = ssub.s32 %s20, %s39
      %s41 = ssub.s32 %s21, %s35
      %s42 = sor.u32 %s40, %s41
      %s43 = ssub.s32 %s22, %s31
      %s44 = sor.u32 %s42, %s43
      %p45 = scmp.eq.s32.totalorder %s44, 0
      %s47 = sadd.s32 %s46, 1
      %s48 = scalar_select %p45, %s46, %s47
      %p51 = pneg %p45
      %p52 = scmp.eq.s32.totalorder %s13, 1
      %p53 = por %p51, %p52
      %p54 = scmp.ne.s32.totalorder %s46, %s49
      %p55 = scmp.eq.s32.totalorder %s13, 0
      %p56 = por %p54, %p55
      %p57 = scmp.ne.s32.totalorder %s46, %s49
      %p58 = scmp.eq.s32.totalorder %s18, 1
      %p59 = por %p57, %p58
      %p60 = scmp.ne.s32.totalorder %s49, %s50
      %p61 = scmp.eq.s32.totalorder %s18, 0
      %p62 = por %p60, %p61
      %p63 = scmp.ne.s32.totalorder %s49, %s50
      %p64 = scmp.eq.s32.totalorder %s19, 1
      %p65 = por %p63, %p64
      %p67 = scmp.ne.s32.totalorder %s50, %s66
      %p68 = scmp.eq.s32.totalorder %s19, 0
      %p69 = por %p67, %p68
      %s70 = ssub.s32 %s20, %s39
      %s71 = ssub.s32 %s22, %s31
      %s72 = sor.u32 %s70, %s71
      %s73 = ssub.s32 %s21, %s35
      %s74 = sor.u32 %s72, %s73
      %p75 = scmp.eq.s32.totalorder %s74, 0
      %s77 = sadd.s32 %s76, 1
      %s78 = scalar_select %p75, %s76, %s77
      %p81 = pneg %p75
      %p82 = scmp.eq.s32.totalorder %s13, 1
      %p83 = por %p81, %p82
      %p84 = scmp.ne.s32.totalorder %s76, %s79
      %p85 = scmp.eq.s32.totalorder %s13, 0
      %p86 = por %p84, %p85
      %p87 = scmp.ne.s32.totalorder %s76, %s79
      %p88 = scmp.eq.s32.totalorder %s18, 1
      %p89 = por %p87, %p88
      %p90 = scmp.ne.s32.totalorder %s79, %s80
      %p91 = scmp.eq.s32.totalorder %s18, 0
      %p92 = por %p90, %p91
      %p93 = scmp.ne.s32.totalorder %s79, %s80
      %p94 = scmp.eq.s32.totalorder %s19, 1
      %p95 = por %p93, %p94
      %p97 = scmp.ne.s32.totalorder %s80, %s96
      %p98 = scmp.eq.s32.totalorder %s19, 0
      %p99 = por %p97, %p98
      %p100 = scmp.le.s32.totalorder 1, %s13
      %p101 = scmp.lt.s32.totalorder %s13, 3
      %p102 = pnand %p100, %p101
      %p103 = pneg %p102
      // Predicated region
      $region9: #{tpu_custom_call.1} parent=5 // pred_check
        _
      $region10: #{tpu_custom_call.1} parent=5 // pred_check_branch
        %105 = sbr.rel (%p102) target = $region12
      $region11: #{tpu_custom_call.1} parent=5 // pred_region
        %s106 = ssub.s32 %s13, 1
      $region12: #{tpu_custom_call.1} parent=5 // pred_fallthru
        _
      %p107 = scmp.lt.s32.totalorder %s13, 2
      // Predicated region
      $region13: #{tpu_custom_call.1} parent=5 // pred_check
        %p108 = pneg %p107
      $region14: #{tpu_custom_call.1} parent=5 // pred_check_branch
        %110 = sbr.rel (%p108) target = $region16
      $region15: #{tpu_custom_call.1} parent=5 // pred_region
        // Predicated region
        $region17: #{tpu_custom_call.1} parent=15 // pred_check
          %p111 = pneg %p56
        $region18: #{tpu_custom_call.1} parent=15 // pred_check_branch
          %113 = sbr.rel (%p111) target = $region20
        $region19: #{tpu_custom_call.1} parent=15 // pred_region
          %s114 = sand.u32 %s46, 1
          %s115 = scalar_lea.sflag [#allocation3], %s114
          %s116 = sand.u32 %s46, 1
          %s117 = smul.addr %s116, 64
          %s118 = scalar_lea.vmem [#allocation2], %s117
          %s119 = smul.u32 4, %s21
          %s120 = smul.u32 2, %s22
          %s122 = ssub.s32 1024, 1024
          %123 = vsyncadd %s115, %s122
          %s124 = smul.addr %s119, 2
          %s125 = sadd.s32 %s120, %s124
          %s126 = smul.addr %s20, 8
          %s127 = sadd.s32 %s125, %s126
          %s128 = smul.addr %s127, 128
          %s129 = scalar_lea.hbm %s0, %s128
          %s130 = sshll.u32 %s118, 4
          %s131 = int_to_ptr.vmem [resolvable:$true] %s130
          %136 = dma.hbm_to_vmem [thread:$0]  %s129, 1024, %s131, %s115, 128, 128, 8
        $region20: #{tpu_custom_call.1} parent=15 // pred_fallthru
          _
      $region16: #{tpu_custom_call.1} parent=5 // pred_fallthru
        _
      %p137 = scmp.le.s32.totalorder 1, %s13
      %p138 = scmp.lt.s32.totalorder %s13, 3
      %p139 = pnand %p137, %p138
      %p140 = pneg %p139
      // Predicated region
      $region21: #{tpu_custom_call.1} parent=5 // pred_check
        _
      $region22: #{tpu_custom_call.1} parent=5 // pred_check_branch
        %142 = sbr.rel (%p139) target = $region24
      $region23: #{tpu_custom_call.1} parent=5 // pred_region
        %s143 = ssub.s32 %s13, 1
        %s144 = sand.u32 %s49, 1
        %s145 = scalar_lea.sflag [#allocation3], %s144
        %s146 = sand.u32 %s49, 1
        %s147 = smul.addr %s146, 64
        %s148 = scalar_lea.vmem [#allocation2], %s147
        // Predicated region
        $region25: #{tpu_custom_call.1} parent=23 // pred_check
          %p149 = pneg %p62
        $region26: #{tpu_custom_call.1} parent=23 // pred_check_branch
          %151 = sbr.rel (%p149) target = $region28
        $region27: #{tpu_custom_call.1} parent=23 // pred_region
          %152 = dma.done %s145, 1024
        $region28: #{tpu_custom_call.1} parent=23 // pred_fallthru
          _
        %s153 = sand.u32 %s49, 1
        %s154 = scalar_lea.sflag [#allocation3], %s153
        %s155 = sand.u32 %s49, 1
        %s156 = smul.addr %s155, 64
        %s157 = scalar_lea.vmem [#allocation2], %s156
        %p158 = pneg %p62
        %p159 = pneg %p59
        %p160 = pneg %p92
        %p161 = pneg %p89
        %s162 = sand.u32 %s79, 1
        %s163 = scalar_lea.sflag [#allocation4], %s162
        %s164 = sand.u32 %s79, 1
        %s165 = smul.addr %s164, 64
        %s166 = scalar_lea.vmem [#allocation5], %s165
        %s167 = smul.u32 4, %s24
        %s168 = smul.u32 2, %s25
        %s169 = smul.u32 16, %s25
        %v170 = vld [vmem:[%s148] sm:$0xff]
        %v171 = vld [vmem:[%s148 + $0x8] sm:$0xff]
        %v172 = vld [vmem:[%s148 + $0x10] sm:$0xff]
        %v173 = vld [vmem:[%s148 + $0x18] sm:$0xff]
        %v174 = vld [vmem:[%s148 + $0x20] sm:$0xff]
        %v175 = vld [vmem:[%s148 + $0x28] sm:$0xff]
        %v176 = vld [vmem:[%s148 + $0x30] sm:$0xff]
        %v177 = vld [vmem:[%s148 + $0x38] sm:$0xff]
        %v178 = vcombine.low %v170, %v174
        %v179 = vcombine.high %v170, %v174
        %v181 = vunpack.c.l.s4 1983009808
        %v182 = vunpack.c.0.s8 %v181
        %v183 = vlaneseq
        %v184 = vshrl.u32 %v183, 7
        %v185 = vsub.s32 %v182, %v184
        %v186 = vrot.slane %v178, %v185
        %v188 = vunpack.c.l.s4 1983009808
        %v189 = vunpack.c.0.s8 %v188
        %v190 = vlaneseq
        %v191 = vshrl.u32 %v190, 7
        %v192 = vsub.s32 %v189, %v191
        %v193 = vrot.slane %v179, %v192
        %v194 = vcombine.low %v172, %v176
        %v195 = vcombine.high %v172, %v176
        %v197 = vunpack.c.l.s4 1983009808
        %v198 = vunpack.c.0.s8 %v197
        %v199 = vlaneseq
        %v200 = vshrl.u32 %v199, 7
        %v201 = vsub.s32 %v198, %v200
        %v202 = vrot.slane %v194, %v201
        %v204 = vunpack.c.l.s4 1983009808
        %v205 = vunpack.c.0.s8 %v204
        %v206 = vlaneseq
        %v207 = vshrl.u32 %v206, 7
        %v208 = vsub.s32 %v205, %v207
        %v209 = vrot.slane %v195, %v208
        %v210 = vcombine.low %v186, %v202
        %v211 = vcombine.high %v186, %v202
        %v213 = vunpack.c.l.s4 1934713408
        %v214 = vunpack.c.0.s8 %v213
        %v215 = vlaneseq
        %v216 = vshrl.u32 %v215, 7
        %v217 = vsub.s32 %v214, %v216
        %v218 = vrot.slane %v210, %v217
        %v220 = vunpack.c.l.s4 1934713408
        %v221 = vunpack.c.0.s8 %v220
        %v222 = vlaneseq
        %v223 = vshrl.u32 %v222, 7
        %v224 = vsub.s32 %v221, %v223
        %v225 = vrot.slane %v211, %v224
        %v226 = vcombine.low %v193, %v209
        %v227 = vcombine.high %v193, %v209
        %v229 = vunpack.c.l.s4 1934713408
        %v230 = vunpack.c.0.s8 %v229
        %v231 = vlaneseq
        %v232 = vshrl.u32 %v231, 7
        %v233 = vsub.s32 %v230, %v232
        %v234 = vrot.slane %v226, %v233
        %v236 = vunpack.c.l.s4 1934713408
        %v237 = vunpack.c.0.s8 %v236
        %v238 = vlaneseq
        %v239 = vshrl.u32 %v238, 7
        %v240 = vsub.s32 %v237, %v239
        %v241 = vrot.slane %v227, %v240
        %v242 = vcombine.high %v218, 0.0
        %v243 = vcombine.high %v225, 0.0
        %v244 = vcombine.high %v234, 0.0
        %v245 = vcombine.high %v241, 0.0
        %v246 = vcombine.low %v171, %v175
        %v247 = vcombine.high %v171, %v175
        %v249 = vunpack.c.l.s4 1983009808
        %v250 = vunpack.c.0.s8 %v249
        %v251 = vlaneseq
        %v252 = vshrl.u32 %v251, 7
        %v253 = vsub.s32 %v250, %v252
        %v254 = vrot.slane %v246, %v253
        %v256 = vunpack.c.l.s4 1983009808
        %v257 = vunpack.c.0.s8 %v256
        %v258 = vlaneseq
        %v259 = vshrl.u32 %v258, 7
        %v260 = vsub.s32 %v257, %v259
        %v261 = vrot.slane %v247, %v260
        %v262 = vcombine.low %v173, %v177
        %v263 = vcombine.high %v173, %v177
        %v265 = vunpack.c.l.s4 1983009808
        %v266 = vunpack.c.0.s8 %v265
        %v267 = vlaneseq
        %v268 = vshrl.u32 %v267, 7
        %v269 = vsub.s32 %v266, %v268
        %v270 = vrot.slane %v262, %v269
        %v272 = vunpack.c.l.s4 1983009808
        %v273 = vunpack.c.0.s8 %v272
        %v274 = vlaneseq
        %v275 = vshrl.u32 %v274, 7
        %v276 = vsub.s32 %v273, %v275
        %v277 = vrot.slane %v263, %v276
        %v278 = vcombine.low %v254, %v270
        %v279 = vcombine.high %v254, %v270
        %v281 = vunpack.c.l.s4 1934713408
        %v282 = vunpack.c.0.s8 %v281
        %v283 = vlaneseq
        %v284 = vshrl.u32 %v283, 7
        %v285 = vsub.s32 %v282, %v284
        %v286 = vrot.slane %v278, %v285
        %v288 = vunpack.c.l.s4 1934713408
        %v289 = vunpack.c.0.s8 %v288
        %v290 = vlaneseq
        %v291 = vshrl.u32 %v290, 7
        %v292 = vsub.s32 %v289, %v291
        %v293 = vrot.slane %v279, %v292
        %v294 = vcombine.low %v261, %v277
        %v295 = vcombine.high %v261, %v277
        %v297 = vunpack.c.l.s4 1934713408
        %v298 = vunpack.c.0.s8 %v297
        %v299 = vlaneseq
        %v300 = vshrl.u32 %v299, 7
        %v301 = vsub.s32 %v298, %v300
        %v302 = vrot.slane %v294, %v301
        %v304 = vunpack.c.l.s4 1934713408
        %v305 = vunpack.c.0.s8 %v304
        %v306 = vlaneseq
        %v307 = vshrl.u32 %v306, 7
        %v308 = vsub.s32 %v305, %v307
        %v309 = vrot.slane %v295, %v308
        %v310 = vcombine.high %v286, 0.0
        %v311 = vcombine.high %v293, 0.0
        %v312 = vcombine.high %v302, 0.0
        %v313 = vcombine.high %v309, 0.0
        %vm314 = vcmask 125952
        %315 = vst.msk [vmem:[%s166] sm:$0xf] %vm314, %v218
        %316 = vst.msk [vmem:[%s166 + $0x4] sm:$0xf] %vm314, %v242
        %317 = vst.msk [vmem:[%s166 + $0x8] sm:$0xf] %vm314, %v225
        %318 = vst.msk [vmem:[%s166 + $0xc] sm:$0xf] %vm314, %v243
        %319 = vst.msk [vmem:[%s166 + $0x10] sm:$0xf] %vm314, %v234
        %320 = vst.msk [vmem:[%s166 + $0x14] sm:$0xf] %vm314, %v244
        %321 = vst.msk [vmem:[%s166 + $0x18] sm:$0xf] %vm314, %v241
        %322 = vst.msk [vmem:[%s166 + $0x1c] sm:$0xf] %vm314, %v245
        %323 = vst.msk [vmem:[%s166 + $0x20] sm:$0xf] %vm314, %v286
        %324 = vst.msk [vmem:[%s166 + $0x24] sm:$0xf] %vm314, %v310
        %325 = vst.msk [vmem:[%s166 + $0x28] sm:$0xf] %vm314, %v293
        %326 = vst.msk [vmem:[%s166 + $0x2c] sm:$0xf] %vm314, %v311
        %327 = vst.msk [vmem:[%s166 + $0x30] sm:$0xf] %vm314, %v302
        %328 = vst.msk [vmem:[%s166 + $0x34] sm:$0xf] %vm314, %v312
        %329 = vst.msk [vmem:[%s166 + $0x38] sm:$0xf] %vm314, %v309
        %330 = vst.msk [vmem:[%s166 + $0x3c] sm:$0xf] %vm314, %v313
        %s331 = sand.u32 %s79, 1
        %s332 = scalar_lea.sflag [#allocation4], %s331
        %s333 = sand.u32 %s79, 1
        %s334 = smul.addr %s333, 64
        %s335 = scalar_lea.vmem [#allocation5], %s334
        // Predicated region
        $region29: #{tpu_custom_call.1} parent=23 // pred_check
          %p336 = pneg %p89
        $region30: #{tpu_custom_call.1} parent=23 // pred_check_branch
          %338 = sbr.rel (%p336) target = $region32
        $region31: #{tpu_custom_call.1} parent=23 // pred_region
          %s339 = smul.u32 16, %s25
          %s341 = ssub.s32 1024, 1024
          %342 = vsyncadd %s332, %s341
          %s343 = sadd.s32 %s24, %s339
          %s344 = smul.addr %s23, 16
          %s345 = sadd.s32 %s343, %s344
          %s346 = smul.addr %s345, 64
          %s347 = scalar_lea.hbm %s1, %s346
          %s348 = sshll.u32 %s335, 4
          %s349 = int_to_ptr.vmem [resolvable:$true] %s348
          %354 = dma.vmem_to_hbm [thread:$0]  %s349, 1024, %s347, %s332, 64, 64, 4
        $region32: #{tpu_custom_call.1} parent=23 // pred_fallthru
          _
      $region24: #{tpu_custom_call.1} parent=5 // pred_fallthru
        _
      %p355 = scmp.le.s32.totalorder 2, %s13
      // Predicated region
      $region33: #{tpu_custom_call.1} parent=5 // pred_check
        %p356 = pneg %p355
      $region34: #{tpu_custom_call.1} parent=5 // pred_check_branch
        %358 = sbr.rel (%p356) target = $region36
      $region35: #{tpu_custom_call.1} parent=5 // pred_region
        %s359 = ssub.s32 %s13, 2
        // Predicated region
        $region37: #{tpu_custom_call.1} parent=35 // pred_check
          %p360 = pneg %p95
        $region38: #{tpu_custom_call.1} parent=35 // pred_check_branch
          %362 = sbr.rel (%p360) target = $region40
        $region39: #{tpu_custom_call.1} parent=35 // pred_region
          %s363 = sand.u32 %s80, 1
          %s364 = scalar_lea.sflag [#allocation4], %s363
          %s365 = sand.u32 %s80, 1
          %s366 = smul.addr %s365, 64
          %s367 = scalar_lea.vmem [#allocation5], %s366
          %368 = dma.done %s364, 1024
        $region40: #{tpu_custom_call.1} parent=35 // pred_fallthru
          _
      $region36: #{tpu_custom_call.1} parent=5 // pred_fallthru
        _
    $region6: #{tpu_custom_call.1} parent=1 // loop_footer
      %s17 = sadd.s32 1, %s13
    $region7: #{tpu_custom_call.1} parent=1 // loop_footer_branch
      %12 = sbr.rel target = $region3
    $region8: #{tpu_custom_call.1} parent=1 // loop_exit
      _
    %369 = vsyncpa [#allocation3], 1
    %s370 = scalar_lea.sflag [#allocation3], 1
    %371 = vsyncpa %s370, 1
    %372 = vsyncpa [#allocation4], 1
    %s373 = scalar_lea.sflag [#allocation4], 1
    %374 = vsyncpa %s373, 1

</llo_original>
